<compile_context>
chip_gen: v5e
topology: v5e:2x2
jax: 0.10.0
libtpu: 0.0.40
codegen_flags: <defaults>
</compile_context>

<pallas_src>
import jax
import jax.numpy as jnp
from jax.experimental import pallas as pl
from jax.experimental.pallas import tpu as pltpu

STATE_SIZE = 16
ACTION_SIZE = 4
H1, H2, H3 = 256, 128, 64

K_PAD = 128      # padded contraction width for layer 1 (state columns / w1 rows)
H3_PAD = 128     # padded width of layer-3 output / layer-4 input
OUT_PAD = 128    # padded (lane-dense) output width; real Q-values in cols [0, ACTION_SIZE)
B_TILE = 128     # batch rows per grid step (feeds the 128/256-wide MXU properly)


def qnet_kernel(x_ref,
                w1_ref, b1_ref,
                w2_ref, b2_ref,
                w3_ref, b3_ref,
                w4_ref, b4_ref,
                o_ref):
    """Whole 4-layer MLP on one (B_TILE, K_PAD) batch tile.

    x / weights are bf16 (MXU-native), biases f32, accumulation f32.
    All matmul dims are multiples of 128, output is a lane-dense 128-wide slab.
    """
    x = x_ref[...]                                                    # (B_TILE, 128) bf16

    h = jnp.dot(x, w1_ref[...], preferred_element_type=jnp.float32) + b1_ref[...]
    h = jnp.maximum(h, 0.0).astype(jnp.bfloat16)                      # (B_TILE, 256)

    h = jnp.dot(h, w2_ref[...], preferred_element_type=jnp.float32) + b2_ref[...]
    h = jnp.maximum(h, 0.0).astype(jnp.bfloat16)                      # (B_TILE, 128)

    h = jnp.dot(h, w3_ref[...], preferred_element_type=jnp.float32) + b3_ref[...]
    h = jnp.maximum(h, 0.0).astype(jnp.bfloat16)                      # (B_TILE, 128) padded

    out = jnp.dot(h, w4_ref[...], preferred_element_type=jnp.float32) + b4_ref[...]
    o_ref[...] = out                                                  # (B_TILE, 128) f32


def init_params(key):
    """Deterministic init mimicking torch.nn.Linear default (U[-1/sqrt(fan_in), +]).

    Weights stored as (in_features, out_features) so forward is x @ W + b,
    identical math to PyTorch's x @ W.T with W of shape (out, in)."""
    dims = [(STATE_SIZE, H1), (H1, H2), (H2, H3), (H3, ACTION_SIZE)]
    params = []
    for (fan_in, fan_out) in dims:
        key, kw, kb = jax.random.split(key, 3)
        bound = 1.0 / jnp.sqrt(float(fan_in))
        w = jax.random.uniform(kw, (fan_in, fan_out), jnp.float32, -bound, bound)
        b = jax.random.uniform(kb, (1, fan_out), jnp.float32, -bound, bound)
        params.append((w, b))
    return params


def prepare_params(params):
    """Zero-pad to lane-dense shapes and cast weights to bf16 (biases stay f32)."""
    (w1, b1), (w2, b2), (w3, b3), (w4, b4) = params
    bf = jnp.bfloat16

    w1p = jnp.zeros((K_PAD, H1), bf).at[:STATE_SIZE, :].set(w1.astype(bf))       # (128, 256)
    b1p = b1.astype(jnp.float32)                                                 # (1, 256)

    w2p = w2.astype(bf)                                                          # (256, 128)
    b2p = b2.astype(jnp.float32)                                                 # (1, 128)

    w3p = jnp.zeros((H2, H3_PAD), bf).at[:, :H3].set(w3.astype(bf))              # (128, 128)
    b3p = jnp.zeros((1, H3_PAD), jnp.float32).at[:, :H3].set(b3)                 # (1, 128)

    w4p = jnp.zeros((H3_PAD, OUT_PAD), bf).at[:H3, :ACTION_SIZE].set(w4.astype(bf))  # (128, 128)
    b4p = jnp.zeros((1, OUT_PAD), jnp.float32).at[:, :ACTION_SIZE].set(b4)           # (1, 128)

    return (w1p, b1p, w2p, b2p, w3p, b3p, w4p, b4p)


def qnetwork_forward(state, prepared_params, *, b_tile=B_TILE):
    """state: (B, STATE_SIZE) f32.  Returns (B, ACTION_SIZE) f32 Q-values."""
    B, S = state.shape
    assert S == STATE_SIZE
    w1p, b1p, w2p, b2p, w3p, b3p, w4p, b4p = prepared_params

    n_tiles = pl.cdiv(B, b_tile)
    b_pad = n_tiles * b_tile

    # Pad batch rows and state columns with zeros; cast activations to bf16.
    x = jnp.pad(state.astype(jnp.bfloat16), ((0, b_pad - B), (0, K_PAD - S)))

    # Grid-invariant operands: whole array resident in VMEM, single-buffered.
    resident = pl.BlockSpec(memory_space=pltpu.MemorySpace.VMEM)

    out = pl.pallas_call(
        qnet_kernel,
        out_shape=jax.ShapeDtypeStruct((b_pad, OUT_PAD), jnp.float32),
        grid=(n_tiles,),
        in_specs=[
            pl.BlockSpec((b_tile, K_PAD), lambda i: (i, 0)),   # batch tile of states
            resident, resident,                                # w1, b1
            resident, resident,                                # w2, b2
            resident, resident,                                # w3, b3
            resident, resident,                                # w4, b4
        ],
        out_specs=pl.BlockSpec((b_tile, OUT_PAD), lambda i: (i, 0)),
        compiler_params=pltpu.CompilerParams(
            dimension_semantics=("parallel",)),                # batch axis -> both TCs on v7x
    )(x, w1p, b1p, w2p, b2p, w3p, b3p, w4p, b4p)

    return out[:B, :ACTION_SIZE]


def reference_forward_f32(state, params):
    """Pure f32 reference (PyTorch semantics)."""
    (w1, b1), (w2, b2), (w3, b3), (w4, b4) = params
    h = jnp.maximum(state @ w1 + b1, 0.0)
    h = jnp.maximum(h @ w2 + b2, 0.0)
    h = jnp.maximum(h @ w3 + b3, 0.0)
    return h @ w4 + b4


def reference_forward_bf16(state, params):
    """Reference that emulates the kernel's bf16-inputs / f32-accumulate math."""
    (w1, b1), (w2, b2), (w3, b3), (w4, b4) = params
    bf = jnp.bfloat16
    h = state.astype(bf)
    h = jnp.dot(h, w1.astype(bf), preferred_element_type=jnp.float32) + b1
    h = jnp.maximum(h, 0.0).astype(bf)
    h = jnp.dot(h, w2.astype(bf), preferred_element_type=jnp.float32) + b2
    h = jnp.maximum(h, 0.0).astype(bf)
    h = jnp.dot(h, w3.astype(bf), preferred_element_type=jnp.float32) + b3
    h = jnp.maximum(h, 0.0).astype(bf)
    return jnp.dot(h, w4.astype(bf), preferred_element_type=jnp.float32) + b4


if __name__ == "__main__":
    key = jax.random.PRNGKey(0)
    key, kx = jax.random.split(key)

    batch = 8
    state = jax.random.normal(kx, (batch, STATE_SIZE), jnp.float32)
    params = init_params(key)
    prepared = prepare_params(params)

    out = qnetwork_forward(state, prepared)
    out = jax.block_until_ready(out)
    assert out.shape == (batch, ACTION_SIZE)

    ref_bf = reference_forward_bf16(state, params)
    ref_f32 = reference_forward_f32(state, params)
    assert jnp.allclose(out, ref_bf, atol=1e-3, rtol=1e-3), "mismatch vs bf16 reference"
    assert jnp.allclose(out, ref_f32, atol=5e-2, rtol=5e-2), "mismatch vs f32 reference"

    # Second check: batch not a multiple of B_TILE -> exercises padding + 2-step grid.
    key, kx2 = jax.random.split(key)
    state2 = jax.random.normal(kx2, (200, STATE_SIZE), jnp.float32)
    out2 = jax.block_until_ready(qnetwork_forward(state2, prepared))
    ref2 = reference_forward_bf16(state2, params)
    assert out2.shape == (200, ACTION_SIZE)
    assert jnp.allclose(out2, ref2, atol=1e-3, rtol=1e-3), "mismatch on multi-tile batch"

    print("KERNEL_OK")
</pallas_src>

<mosaic_0001>
module attributes {stable_mosaic.version = 11 : i64} {
  func.func @qnet_kernel(%arg0: i32, %arg1: memref<128x128xbf16, #tpu.memory_space<vmem>>, %arg2: memref<128x256xbf16, #tpu.memory_space<vmem>>, %arg3: memref<1x256xf32, #tpu.memory_space<vmem>>, %arg4: memref<256x128xbf16, #tpu.memory_space<vmem>>, %arg5: memref<1x128xf32, #tpu.memory_space<vmem>>, %arg6: memref<128x128xbf16, #tpu.memory_space<vmem>>, %arg7: memref<1x128xf32, #tpu.memory_space<vmem>>, %arg8: memref<128x128xbf16, #tpu.memory_space<vmem>>, %arg9: memref<1x128xf32, #tpu.memory_space<vmem>>, %arg10: memref<128x128xf32, #tpu.memory_space<vmem>>) attributes {dimension_semantics = [#tpu.dimension_semantics<parallel>], iteration_bounds = array<i64: 1>, scalar_prefetch = 0 : i64, scratch_operands = 0 : i64, tpu.core_type = #tpu.core_type<tc>, window_params = [{transform_indices = @transform_0, window_bounds = array<i64: 128, 128>}, {pipeline_mode = #tpu.pipeline_mode<synchronous>, transform_indices = @transform_1, window_bounds = array<i64: 128, 256>}, {pipeline_mode = #tpu.pipeline_mode<synchronous>, transform_indices = @transform_2, window_bounds = array<i64: 1, 256>}, {pipeline_mode = #tpu.pipeline_mode<synchronous>, transform_indices = @transform_3, window_bounds = array<i64: 256, 128>}, {pipeline_mode = #tpu.pipeline_mode<synchronous>, transform_indices = @transform_4, window_bounds = array<i64: 1, 128>}, {pipeline_mode = #tpu.pipeline_mode<synchronous>, transform_indices = @transform_5, window_bounds = array<i64: 128, 128>}, {pipeline_mode = #tpu.pipeline_mode<synchronous>, transform_indices = @transform_6, window_bounds = array<i64: 1, 128>}, {pipeline_mode = #tpu.pipeline_mode<synchronous>, transform_indices = @transform_7, window_bounds = array<i64: 128, 128>}, {pipeline_mode = #tpu.pipeline_mode<synchronous>, transform_indices = @transform_8, window_bounds = array<i64: 1, 128>}, {transform_indices = @transform_9, window_bounds = array<i64: 128, 128>}]} {
    %c0 = arith.constant 0 : index
    %c0_0 = arith.constant 0 : index
    %0 = vector.load %arg1[%c0, %c0_0] : memref<128x128xbf16, #tpu.memory_space<vmem>>, vector<128x128xbf16>
    %c0_1 = arith.constant 0 : index
    %c0_2 = arith.constant 0 : index
    %1 = vector.load %arg2[%c0_1, %c0_2] : memref<128x256xbf16, #tpu.memory_space<vmem>>, vector<128x256xbf16>
    %cst = arith.constant dense<0.000000e+00> : vector<128x256xf32>
    %2 = tpu.matmul %0, %1, %cst {dimension_numbers = #tpu.dot_dimension_numbers<[1], [0], [0], [1], [0, 0, 1, 1], [], []>} : vector<128x128xbf16>, vector<128x256xbf16>, vector<128x256xf32> -> vector<128x256xf32>
    %c0_3 = arith.constant 0 : index
    %c0_4 = arith.constant 0 : index
    %3 = vector.load %arg3[%c0_3, %c0_4] : memref<1x256xf32, #tpu.memory_space<vmem>>, vector<1x256xf32>
    %4 = vector.broadcast %3 : vector<1x256xf32> to vector<128x256xf32>
    %5 = arith.addf %2, %4 : vector<128x256xf32>
    %cst_5 = arith.constant 0.000000e+00 : f32
    %6 = vector.broadcast %cst_5 : f32 to vector<128x256xf32>
    %7 = arith.maximumf %5, %6 : vector<128x256xf32>
    %8 = arith.truncf %7 : vector<128x256xf32> to vector<128x256xbf16>
    %c0_6 = arith.constant 0 : index
    %c0_7 = arith.constant 0 : index
    %9 = vector.load %arg4[%c0_6, %c0_7] : memref<256x128xbf16, #tpu.memory_space<vmem>>, vector<256x128xbf16>
    %cst_8 = arith.constant dense<0.000000e+00> : vector<128x128xf32>
    %10 = tpu.matmul %8, %9, %cst_8 {dimension_numbers = #tpu.dot_dimension_numbers<[1], [0], [0], [1], [0, 0, 1, 1], [], []>} : vector<128x256xbf16>, vector<256x128xbf16>, vector<128x128xf32> -> vector<128x128xf32>
    %c0_9 = arith.constant 0 : index
    %c0_10 = arith.constant 0 : index
    %11 = vector.load %arg5[%c0_9, %c0_10] : memref<1x128xf32, #tpu.memory_space<vmem>>, vector<1x128xf32>
    %12 = vector.broadcast %11 : vector<1x128xf32> to vector<128x128xf32>
    %13 = arith.addf %10, %12 : vector<128x128xf32>
    %cst_11 = arith.constant 0.000000e+00 : f32
    %14 = vector.broadcast %cst_11 : f32 to vector<128x128xf32>
    %15 = arith.maximumf %13, %14 : vector<128x128xf32>
    %16 = arith.truncf %15 : vector<128x128xf32> to vector<128x128xbf16>
    %c0_12 = arith.constant 0 : index
    %c0_13 = arith.constant 0 : index
    %17 = vector.load %arg6[%c0_12, %c0_13] : memref<128x128xbf16, #tpu.memory_space<vmem>>, vector<128x128xbf16>
    %cst_14 = arith.constant dense<0.000000e+00> : vector<128x128xf32>
    %18 = tpu.matmul %16, %17, %cst_14 {dimension_numbers = #tpu.dot_dimension_numbers<[1], [0], [0], [1], [0, 0, 1, 1], [], []>} : vector<128x128xbf16>, vector<128x128xbf16>, vector<128x128xf32> -> vector<128x128xf32>
    %c0_15 = arith.constant 0 : index
    %c0_16 = arith.constant 0 : index
    %19 = vector.load %arg7[%c0_15, %c0_16] : memref<1x128xf32, #tpu.memory_space<vmem>>, vector<1x128xf32>
    %20 = vector.broadcast %19 : vector<1x128xf32> to vector<128x128xf32>
    %21 = arith.addf %18, %20 : vector<128x128xf32>
    %cst_17 = arith.constant 0.000000e+00 : f32
    %22 = vector.broadcast %cst_17 : f32 to vector<128x128xf32>
    %23 = arith.maximumf %21, %22 : vector<128x128xf32>
    %24 = arith.truncf %23 : vector<128x128xf32> to vector<128x128xbf16>
    %c0_18 = arith.constant 0 : index
    %c0_19 = arith.constant 0 : index
    %25 = vector.load %arg8[%c0_18, %c0_19] : memref<128x128xbf16, #tpu.memory_space<vmem>>, vector<128x128xbf16>
    %cst_20 = arith.constant dense<0.000000e+00> : vector<128x128xf32>
    %26 = tpu.matmul %24, %25, %cst_20 {dimension_numbers = #tpu.dot_dimension_numbers<[1], [0], [0], [1], [0, 0, 1, 1], [], []>} : vector<128x128xbf16>, vector<128x128xbf16>, vector<128x128xf32> -> vector<128x128xf32>
    %c0_21 = arith.constant 0 : index
    %c0_22 = arith.constant 0 : index
    %27 = vector.load %arg9[%c0_21, %c0_22] : memref<1x128xf32, #tpu.memory_space<vmem>>, vector<1x128xf32>
    %28 = vector.broadcast %27 : vector<1x128xf32> to vector<128x128xf32>
    %29 = arith.addf %26, %28 : vector<128x128xf32>
    %c0_23 = arith.constant 0 : index
    %c0_24 = arith.constant 0 : index
    %30 = vector.load %arg10[%c0_23, %c0_24] : memref<128x128xf32, #tpu.memory_space<vmem>>, vector<128x128xf32>
    tpu.vector_store %arg10[%c0_23, %c0_24], %29 {strides = array<i32>} : memref<128x128xf32, #tpu.memory_space<vmem>>, vector<128x128xf32>,
    return
  }
  func.func @transform_0(%arg0: i32) -> (i32, i32) {
    %c0_i32 = arith.constant 0 : i32
    %c0_i32_0 = arith.constant 0 : i32
    return %arg0, %c0_i32 : i32, i32
  }
  func.func @transform_1(%arg0: i32) -> (i32, i32) {
    %c0_i32 = arith.constant 0 : i32
    %c0_i32_0 = arith.constant 0 : i32
    %c0_i32_1 = arith.constant 0 : i32
    return %c0_i32, %c0_i32_0 : i32, i32
  }
  func.func @transform_2(%arg0: i32) -> (i32, i32) {
    %c0_i32 = arith.constant 0 : i32
    %c0_i32_0 = arith.constant 0 : i32
    %c0_i32_1 = arith.constant 0 : i32
    return %c0_i32, %c0_i32_0 : i32, i32
  }
  func.func @transform_3(%arg0: i32) -> (i32, i32) {
    %c0_i32 = arith.constant 0 : i32
    %c0_i32_0 = arith.constant 0 : i32
    %c0_i32_1 = arith.constant 0 : i32
    return %c0_i32, %c0_i32_0 : i32, i32
  }
  func.func @transform_4(%arg0: i32) -> (i32, i32) {
    %c0_i32 = arith.constant 0 : i32
    %c0_i32_0 = arith.constant 0 : i32
    %c0_i32_1 = arith.constant 0 : i32
    return %c0_i32, %c0_i32_0 : i32, i32
  }
  func.func @transform_5(%arg0: i32) -> (i32, i32) {
    %c0_i32 = arith.constant 0 : i32
    %c0_i32_0 = arith.constant 0 : i32
    %c0_i32_1 = arith.constant 0 : i32
    return %c0_i32, %c0_i32_0 : i32, i32
  }
  func.func @transform_6(%arg0: i32) -> (i32, i32) {
    %c0_i32 = arith.constant 0 : i32
    %c0_i32_0 = arith.constant 0 : i32
    %c0_i32_1 = arith.constant 0 : i32
    return %c0_i32, %c0_i32_0 : i32, i32
  }
  func.func @transform_7(%arg0: i32) -> (i32, i32) {
    %c0_i32 = arith.constant 0 : i32
    %c0_i32_0 = arith.constant 0 : i32
    %c0_i32_1 = arith.constant 0 : i32
    return %c0_i32, %c0_i32_0 : i32, i32
  }
  func.func @transform_8(%arg0: i32) -> (i32, i32) {
    %c0_i32 = arith.constant 0 : i32
    %c0_i32_0 = arith.constant 0 : i32
    %c0_i32_1 = arith.constant 0 : i32
    return %c0_i32, %c0_i32_0 : i32, i32
  }
  func.func @transform_9(%arg0: i32) -> (i32, i32) {
    %c0_i32 = arith.constant 0 : i32
    %c0_i32_0 = arith.constant 0 : i32
    return %arg0, %c0_i32 : i32, i32
  }
}

</mosaic_0001>

<llo_original>
// kernel: tpu_custom_call.1
$region0: #{tpu_custom_call.1}
  #allocation0 [shape = 'u32[]', space=smem, size = 0x4, offset = 0x4, fixed_abs, tag = 'smem constant byte address 0x4 - core index']
  #allocation1 [shape = 'u32[72,128]{1,0:T(1,128)}', space=vmem, size = 0x9000, scoped, tag = 'internal scratch']
  %s0 = inlined_call_operand.hbm [shape: bf16[128,128], index: 0, kind: input, shape index: {}]
  %s1 = inlined_call_operand.hbm [shape: bf16[128,256], index: 1, kind: input, shape index: {}]
  %s2 = inlined_call_operand.hbm [shape: f32[1,256], index: 2, kind: input, shape index: {}]
  %s3 = inlined_call_operand.hbm [shape: bf16[256,128], index: 3, kind: input, shape index: {}]
  %s4 = inlined_call_operand.vmem [shape: f32[1,128], index: 4, kind: input, shape index: {}]
  %s5 = inlined_call_operand.hbm [shape: bf16[128,128], index: 5, kind: input, shape index: {}]
  %s6 = inlined_call_operand.vmem [shape: f32[1,128], index: 6, kind: input, shape index: {}]
  %s7 = inlined_call_operand.hbm [shape: bf16[128,128], index: 7, kind: input, shape index: {}]
  %s8 = inlined_call_operand.vmem [shape: f32[1,128], index: 8, kind: input, shape index: {}]
  %s9 = inlined_call_operand.hbm [shape: f32[128,128], index: 9, kind: output, shape index: {}]
  %s10 = sld [smem:[#allocation0]]
  $region70: #{tpu_custom_call.1} parent=0
    _
  %s12 = ssub.s32 1, %s10
  %s13 = scalar_select 0, %s12, %s10
  $region1: #{tpu_custom_call.1} parent=0
    #allocation2 [shape = 'u8[32768]{0}', space=vmem, size = 0x8000, scoped, tag = 'input window, operand 0, single buffered']
    #allocation3 [shape = 's32[1]{0}', space=sflag, size = 0x4, scoped, tag = 'scoped memory for tpu_custom_call.1']
    #allocation4 [shape = 's32[1]{0}', space=sflag, size = 0x4, scoped, tag = 'scoped memory for tpu_custom_call.1']
    #allocation5 [shape = 'u8[65536]{0}', space=vmem, size = 0x10000, scoped, tag = 'input window, operand 1, single buffered']
    #allocation6 [shape = 's32[1]{0}', space=sflag, size = 0x4, scoped, tag = 'scoped memory for tpu_custom_call.1']
    #allocation7 [shape = 'u8[1024]{0}', space=vmem, size = 0x400, scoped, tag = 'input window, operand 2, single buffered']
    #allocation8 [shape = 'u8[65536]{0}', space=vmem, size = 0x10000, scoped, tag = 'input window, operand 3, single buffered']
    #allocation9 [shape = 's32[1]{0}', space=sflag, size = 0x4, scoped, tag = 'scoped memory for tpu_custom_call.1']
    #allocation10 [shape = 'u8[32768]{0}', space=vmem, size = 0x8000, scoped, tag = 'input window, operand 5, single buffered']
    #allocation11 [shape = 'u8[32768]{0}', space=vmem, size = 0x8000, scoped, tag = 'input window, operand 7, single buffered']
    #allocation12 [shape = 's32[1]{0}', space=sflag, size = 0x4, scoped, tag = 'scoped memory for tpu_custom_call.1']
    #allocation13 [shape = 'u8[65536]{0}', space=vmem, size = 0x10000, scoped, tag = 'output window, operand 0, single buffered']
    %14 = vsyncpa [#allocation3], 0
    %15 = vsyncpa [#allocation6], 0
    %16 = vsyncpa [#allocation9], 0
    %17 = vsyncpa [#allocation12], 0
    %18 = vsyncpa [#allocation4], 0
    // Predicated region
    $region2: #{tpu_custom_call.1} parent=1 // pred_check
      _
    $region3: #{tpu_custom_call.1} parent=1 // pred_check_branch
      %20 = sbr.rel (0) target = $region5
    $region4: #{tpu_custom_call.1} parent=1 // pred_region
      %22 = vsyncadd [#allocation3], 0
      %s23 = sshll.u32 %s0, 4
      %s24 = int_to_ptr.hbm [resolvable:$true] %s23
      %s25 = sshll.u32 [#allocation2], 4
      %s26 = int_to_ptr.vmem [resolvable:$true] %s25
      %31 = dma.hbm_to_vmem [thread:$0]  %s24, 1024, %s26, [#allocation3], 64, 64, 4
    $region5: #{tpu_custom_call.1} parent=1 // pred_fallthru
      _
    // Predicated region
    $region6: #{tpu_custom_call.1} parent=1 // pred_check
      _
    $region7: #{tpu_custom_call.1} parent=1 // pred_check_branch
      %33 = sbr.rel (0) target = $region9
    $region8: #{tpu_custom_call.1} parent=1 // pred_region
      %35 = vsyncadd [#allocation6], 0
      %s36 = sshll.u32 %s1, 4
      %s37 = int_to_ptr.hbm [resolvable:$true] %s36
      %s38 = sshll.u32 [#allocation5], 4
      %s39 = int_to_ptr.vmem [resolvable:$true] %s38
      %44 = dma.hbm_to_vmem [thread:$0]  %s37, 2048, %s39, [#allocation6], 128, 128, 8
    $region9: #{tpu_custom_call.1} parent=1 // pred_fallthru
      _
    // Predicated region
    $region10: #{tpu_custom_call.1} parent=1 // pred_check
      _
    $region11: #{tpu_custom_call.1} parent=1 // pred_check_branch
      %46 = sbr.rel (0) target = $region13
    $region12: #{tpu_custom_call.1} parent=1 // pred_region
      %48 = vsyncadd [#allocation6], 0
      %s50 = sshll.u32 %s2, 4
      %s51 = int_to_ptr.hbm [resolvable:$true] %s50
      %s52 = sshll.u32 [#allocation7], 4
      %s53 = int_to_ptr.vmem [resolvable:$true] %s52
      %55 = dma.hbm_to_vmem [thread:$0]  %s51, 32, %s53, [#allocation6]
    $region13: #{tpu_custom_call.1} parent=1 // pred_fallthru
      _
    // Predicated region
    $region14: #{tpu_custom_call.1} parent=1 // pred_check
      _
    $region15: #{tpu_custom_call.1} parent=1 // pred_check_branch
      %57 = sbr.rel (0) target = $region17
    $region16: #{tpu_custom_call.1} parent=1 // pred_region
      %59 = vsyncadd [#allocation9], 0
      %s60 = sshll.u32 %s3, 4
      %s61 = int_to_ptr.hbm [resolvable:$true] %s60
      %s62 = sshll.u32 [#allocation8], 4
      %s63 = int_to_ptr.vmem [resolvable:$true] %s62
      %68 = dma.hbm_to_vmem [thread:$0]  %s61, 2048, %s63, [#allocation9], 64, 64, 4
    $region17: #{tpu_custom_call.1} parent=1 // pred_fallthru
      _
    // Predicated region
    $region18: #{tpu_custom_call.1} parent=1 // pred_check
      _
    $region19: #{tpu_custom_call.1} parent=1 // pred_check_branch
      %70 = sbr.rel (0) target = $region21
    $region20: #{tpu_custom_call.1} parent=1 // pred_region
      _
    $region21: #{tpu_custom_call.1} parent=1 // pred_fallthru
      _
    // Predicated region
    $region22: #{tpu_custom_call.1} parent=1 // pred_check
      _
    $region23: #{tpu_custom_call.1} parent=1 // pred_check_branch
      %72 = sbr.rel (0) target = $region25
    $region24: #{tpu_custom_call.1} parent=1 // pred_region
      %74 = vsyncadd [#allocation9], 0
      %s75 = sshll.u32 %s5, 4
      %s76 = int_to_ptr.hbm [resolvable:$true] %s75
      %s77 = sshll.u32 [#allocation10], 4
      %s78 = int_to_ptr.vmem [resolvable:$true] %s77
      %83 = dma.hbm_to_vmem [thread:$0]  %s76, 1024, %s78, [#allocation9], 64, 64, 4
    $region25: #{tpu_custom_call.1} parent=1 // pred_fallthru
      _
    // Predicated region
    $region26: #{tpu_custom_call.1} parent=1 // pred_check
      _
    $region27: #{tpu_custom_call.1} parent=1 // pred_check_branch
      %85 = sbr.rel (0) target = $region29
    $region28: #{tpu_custom_call.1} parent=1 // pred_region
      _
    $region29: #{tpu_custom_call.1} parent=1 // pred_fallthru
      _
    // Predicated region
    $region30: #{tpu_custom_call.1} parent=1 // pred_check
      _
    $region31: #{tpu_custom_call.1} parent=1 // pred_check_branch
      %87 = sbr.rel (0) target = $region33
    $region32: #{tpu_custom_call.1} parent=1 // pred_region
      %89 = vsyncadd [#allocation12], 0
      %s90 = sshll.u32 %s7, 4
      %s91 = int_to_ptr.hbm [resolvable:$true] %s90
      %s92 = sshll.u32 [#allocation11], 4
      %s93 = int_to_ptr.vmem [resolvable:$true] %s92
      %98 = dma.hbm_to_vmem [thread:$0]  %s91, 1024, %s93, [#allocation12], 64, 64, 4
    $region33: #{tpu_custom_call.1} parent=1 // pred_fallthru
      _
    // Predicated region
    $region34: #{tpu_custom_call.1} parent=1 // pred_check
      _
    $region35: #{tpu_custom_call.1} parent=1 // pred_check_branch
      %100 = sbr.rel (0) target = $region37
    $region36: #{tpu_custom_call.1} parent=1 // pred_region
      _
    $region37: #{tpu_custom_call.1} parent=1 // pred_fallthru
      _
    // Predicated region
    $region38: #{tpu_custom_call.1} parent=1 // pred_check
      _
    $region39: #{tpu_custom_call.1} parent=1 // pred_check_branch
      %102 = sbr.rel (0) target = $region41
    $region40: #{tpu_custom_call.1} parent=1 // pred_region
      %104 = dma.done [#allocation3], 1024
    $region41: #{tpu_custom_call.1} parent=1 // pred_fallthru
      _
    // Predicated region
    $region42: #{tpu_custom_call.1} parent=1 // pred_check
      _
    $region43: #{tpu_custom_call.1} parent=1 // pred_check_branch
      %106 = sbr.rel (0) target = $region45
    $region44: #{tpu_custom_call.1} parent=1 // pred_region
      %108 = dma.done [#allocation6], 2048
    $region45: #{tpu_custom_call.1} parent=1 // pred_fallthru
      _
    // Predicated region
    $region46: #{tpu_custom_call.1} parent=1 // pred_check
      _
    $region47: #{tpu_custom_call.1} parent=1 // pred_check_branch
      %110 = sbr.rel (0) target = $region49
    $region48: #{tpu_custom_call.1} parent=1 // pred_region
      %112 = dma.done [#allocation6], 32
    $region49: #{tpu_custom_call.1} parent=1 // pred_fallthru
      _
    // Predicated region
    $region50: #{tpu_custom_call.1} parent=1 // pred_check
      _
    $region51: #{tpu_custom_call.1} parent=1 // pred_check_branch
      %114 = sbr.rel (0) target = $region53
    $region52: #{tpu_custom_call.1} parent=1 // pred_region
      %116 = dma.done [#allocation9], 2048
    $region53: #{tpu_custom_call.1} parent=1 // pred_fallthru
      _
    // Predicated region
    $region54: #{tpu_custom_call.1} parent=1 // pred_check
      _
    $region55: #{tpu_custom_call.1} parent=1 // pred_check_branch
      %118 = sbr.rel (0) target = $region57
    $region56: #{tpu_custom_call.1} parent=1 // pred_region
      %120 = dma.done [#allocation9], 1024
    $region57: #{tpu_custom_call.1} parent=1 // pred_fallthru
      _
    // Predicated region
    $region58: #{tpu_custom_call.1} parent=1 // pred_check
      _
    $region59: #{tpu_custom_call.1} parent=1 // pred_check_branch
      %122 = sbr.rel (0) target = $region61
    $region60: #{tpu_custom_call.1} parent=1 // pred_region
      %124 = dma.done [#allocation12], 1024
    $region61: #{tpu_custom_call.1} parent=1 // pred_fallthru
      _
    %v125 = vld [vmem:[#allocation2] sm:$0xf]
    %v126 = vld [vmem:[#allocation2 + $0x4] sm:$0xf]
    %v127 = vld [vmem:[#allocation2 + $0x8] sm:$0xf]
    %v128 = vld [vmem:[#allocation2 + $0xc] sm:$0xf]
    %v129 = vld [vmem:[#allocation2 + $0x10] sm:$0xf]
    %v130 = vld [vmem:[#allocation2 + $0x14] sm:$0xf]
    %v131 = vld [vmem:[#allocation2 + $0x18] sm:$0xf]
    %v132 = vld [vmem:[#allocation2 + $0x1c] sm:$0xf]
    %v133 = vld [vmem:[#allocation2 + $0x20] sm:$0xf]
    %v134 = vld [vmem:[#allocation2 + $0x24] sm:$0xf]
    %v135 = vld [vmem:[#allocation2 + $0x28] sm:$0xf]
    %v136 = vld [vmem:[#allocation2 + $0x2c] sm:$0xf]
    %v137 = vld [vmem:[#allocation2 + $0x30] sm:$0xf]
    %v138 = vld [vmem:[#allocation2 + $0x34] sm:$0xf]
    %v139 = vld [vmem:[#allocation2 + $0x38] sm:$0xf]
    %v140 = vld [vmem:[#allocation2 + $0x3c] sm:$0xf]
    %v141 = vld [vmem:[#allocation5] sm:$0xff]
    %v142 = vld [vmem:[#allocation5 + $0x8] sm:$0xff]
    %v143 = vld [vmem:[#allocation5 + $0x10] sm:$0xff]
    %v144 = vld [vmem:[#allocation5 + $0x18] sm:$0xff]
    %v145 = vld [vmem:[#allocation5 + $0x20] sm:$0xff]
    %v146 = vld [vmem:[#allocation5 + $0x28] sm:$0xff]
    %v147 = vld [vmem:[#allocation5 + $0x30] sm:$0xff]
    %v148 = vld [vmem:[#allocation5 + $0x38] sm:$0xff]
    %v149 = vld [vmem:[#allocation5 + $0x40] sm:$0xff]
    %v150 = vld [vmem:[#allocation5 + $0x48] sm:$0xff]
    %v151 = vld [vmem:[#allocation5 + $0x50] sm:$0xff]
    %v152 = vld [vmem:[#allocation5 + $0x58] sm:$0xff]
    %v153 = vld [vmem:[#allocation5 + $0x60] sm:$0xff]
    %v154 = vld [vmem:[#allocation5 + $0x68] sm:$0xff]
    %v155 = vld [vmem:[#allocation5 + $0x70] sm:$0xff]
    %v156 = vld [vmem:[#allocation5 + $0x78] sm:$0xff]
    %v157 = vld [vmem:[#allocation7] sm:$0x3]
    %v159 = vperm.slane %v157, 0
    %v160 = vperm.slane %v157, 1
    %v179 = vunpack.c.l.b16 %v125
    %v180 = vunpack.c.l.b16 %v126
    %v181 = vunpack.c.l.b16 %v127
    %v182 = vunpack.c.l.b16 %v128
    %v183 = vunpack.c.l.b16 %v129
    %v184 = vunpack.c.l.b16 %v130
    %v185 = vunpack.c.l.b16 %v131
    %v186 = vunpack.c.l.b16 %v132
    %v187 = vunpack.c.l.b16 %v133
    %v188 = vunpack.c.l.b16 %v134
    %v189 = vunpack.c.l.b16 %v135
    %v190 = vunpack.c.l.b16 %v136
    %v191 = vunpack.c.l.b16 %v137
    %v192 = vunpack.c.l.b16 %v138
    %v193 = vunpack.c.l.b16 %v139
    %v194 = vunpack.c.l.b16 %v140
    %v195 = vpack.c.b16 %v180, %v179
    %v196 = vpack.c.b16 %v182, %v181
    %v197 = vpack.c.b16 %v184, %v183
    %v198 = vpack.c.b16 %v186, %v185
    %v199 = vpack.c.b16 %v188, %v187
    %v200 = vpack.c.b16 %v190, %v189
    %v201 = vpack.c.b16 %v192, %v191
    %v202 = vpack.c.b16 %v194, %v193
    %v227 = vunpack.c.l.b16 %v141
    %v228 = vunpack.c.h.b16 %v141
    %v229 = vunpack.c.l.b16 %v142
    %v230 = vunpack.c.h.b16 %v142
    %v231 = vunpack.c.l.b16 %v143
    %v232 = vunpack.c.h.b16 %v143
    %v233 = vunpack.c.l.b16 %v144
    %v234 = vunpack.c.h.b16 %v144
    %v235 = vunpack.c.l.b16 %v145
    %v236 = vunpack.c.h.b16 %v145
    %v237 = vunpack.c.l.b16 %v146
    %v238 = vunpack.c.h.b16 %v146
    %v239 = vunpack.c.l.b16 %v147
    %v240 = vunpack.c.h.b16 %v147
    %v241 = vunpack.c.l.b16 %v148
    %v242 = vunpack.c.h.b16 %v148
    %v243 = vunpack.c.l.b16 %v149
    %v244 = vunpack.c.h.b16 %v149
    %v245 = vunpack.c.l.b16 %v150
    %v246 = vunpack.c.h.b16 %v150
    %v247 = vunpack.c.l.b16 %v151
    %v248 = vunpack.c.h.b16 %v151
    %v249 = vunpack.c.l.b16 %v152
    %v250 = vunpack.c.h.b16 %v152
    %v251 = vunpack.c.l.b16 %v153
    %v252 = vunpack.c.h.b16 %v153
    %v253 = vunpack.c.l.b16 %v154
    %v254 = vunpack.c.h.b16 %v154
    %v255 = vunpack.c.l.b16 %v155
    %v256 = vunpack.c.h.b16 %v155
    %v257 = vunpack.c.l.b16 %v156
    %v258 = vunpack.c.h.b16 %v156
    %v259 = vpack.c.b16 %v229, %v227
    %v260 = vpack.c.b16 %v230, %v228
    %v261 = vpack.c.b16 %v233, %v231
    %v262 = vpack.c.b16 %v234, %v232
    %v263 = vpack.c.b16 %v237, %v235
    %v264 = vpack.c.b16 %v238, %v236
    %v265 = vpack.c.b16 %v241, %v239
    %v266 = vpack.c.b16 %v242, %v240
    %v267 = vpack.c.b16 %v245, %v243
    %v268 = vpack.c.b16 %v246, %v244
    %v269 = vpack.c.b16 %v249, %v247
    %v270 = vpack.c.b16 %v250, %v248
    %v271 = vpack.c.b16 %v253, %v251
    %v272 = vpack.c.b16 %v254, %v252
    %v273 = vpack.c.b16 %v257, %v255
    %v274 = vpack.c.b16 %v258, %v256
    %291 = vmatpush.bf16.msra.mxu0 %v273
    %292 = vmatpush.bf16.msra.mxu0 %v271
    %293 = vmatpush.bf16.msra.mxu0 %v269
    %294 = vmatpush.bf16.msra.mxu0 %v267
    %295 = vmatpush.bf16.msra.mxu0 %v265
    %296 = vmatpush.bf16.msra.mxu0 %v263
    %297 = vmatpush.bf16.msra.mxu0 %v261
    %298 = vmatpush.bf16.msra.mxu0 %v259
    %299 = vmatmul.bf16.gmra.mxu0 %v195
    %v300 = vpop.f32.mrf.mxu0
    %v301 = vadd.f32 %v159, %v300
    %v302 = vpop.f32.mrf.mxu0
    %v303 = vadd.f32 %v159, %v302
    %304 = vmatmul.bf16.gmra.mxu0 %v196
    %v305 = vpop.f32.mrf.mxu0
    %v306 = vadd.f32 %v159, %v305
    %v307 = vpop.f32.mrf.mxu0
    %v308 = vadd.f32 %v159, %v307
    %309 = vmatmul.bf16.gmra.mxu0 %v197
    %v310 = vpop.f32.mrf.mxu0
    %v311 = vadd.f32 %v159, %v310
    %v312 = vpop.f32.mrf.mxu0
    %v313 = vadd.f32 %v159, %v312
    %314 = vmatmul.bf16.gmra.mxu0 %v198
    %v315 = vpop.f32.mrf.mxu0
    %v316 = vadd.f32 %v159, %v315
    %v317 = vpop.f32.mrf.mxu0
    %v318 = vadd.f32 %v159, %v317
    %319 = vmatmul.bf16.gmra.mxu0 %v199
    %v320 = vpop.f32.mrf.mxu0
    %v321 = vadd.f32 %v159, %v320
    %v322 = vpop.f32.mrf.mxu0
    %v323 = vadd.f32 %v159, %v322
    %324 = vmatmul.bf16.gmra.mxu0 %v200
    %v325 = vpop.f32.mrf.mxu0
    %v326 = vadd.f32 %v159, %v325
    %v327 = vpop.f32.mrf.mxu0
    %v328 = vadd.f32 %v159, %v327
    %329 = vmatmul.bf16.gmra.mxu0 %v201
    %v330 = vpop.f32.mrf.mxu0
    %v331 = vadd.f32 %v159, %v330
    %v332 = vpop.f32.mrf.mxu0
    %v333 = vadd.f32 %v159, %v332
    %334 = vmatmul.bf16.gmra.mxu0 %v202
    %v335 = vpop.f32.mrf.mxu0
    %v336 = vadd.f32 %v159, %v335
    %v337 = vpop.f32.mrf.mxu0
    %v338 = vadd.f32 %v159, %v337
    %339 = vdwg.mxu0
    %340 = vmatpush.bf16.msra.mxu0 %v274
    %341 = vmatpush.bf16.msra.mxu0 %v272
    %342 = vmatpush.bf16.msra.mxu0 %v270
    %343 = vmatpush.bf16.msra.mxu0 %v268
    %344 = vmatpush.bf16.msra.mxu0 %v266
    %345 = vmatpush.bf16.msra.mxu0 %v264
    %346 = vmatpush.bf16.msra.mxu0 %v262
    %347 = vmatpush.bf16.msra.mxu0 %v260
    %348 = vmatmul.bf16.gmra.mxu0 %v195
    %v349 = vpop.f32.mrf.mxu0
    %v350 = vadd.f32 %v160, %v349
    %v351 = vpop.f32.mrf.mxu0
    %v352 = vadd.f32 %v160, %v351
    %353 = vmatmul.bf16.gmra.mxu0 %v196
    %v354 = vpop.f32.mrf.mxu0
    %v355 = vadd.f32 %v160, %v354
    %v356 = vpop.f32.mrf.mxu0
    %v357 = vadd.f32 %v160, %v356
    %358 = vmatmul.bf16.gmra.mxu0 %v197
    %v359 = vpop.f32.mrf.mxu0
    %v360 = vadd.f32 %v160, %v359
    %v361 = vpop.f32.mrf.mxu0
    %v362 = vadd.f32 %v160, %v361
    %363 = vmatmul.bf16.gmra.mxu0 %v198
    %v364 = vpop.f32.mrf.mxu0
    %v365 = vadd.f32 %v160, %v364
    %v366 = vpop.f32.mrf.mxu0
    %v367 = vadd.f32 %v160, %v366
    %368 = vmatmul.bf16.gmra.mxu0 %v199
    %v369 = vpop.f32.mrf.mxu0
    %v370 = vadd.f32 %v160, %v369
    %v371 = vpop.f32.mrf.mxu0
    %v372 = vadd.f32 %v160, %v371
    %373 = vmatmul.bf16.gmra.mxu0 %v200
    %v374 = vpop.f32.mrf.mxu0
    %v375 = vadd.f32 %v160, %v374
    %v376 = vpop.f32.mrf.mxu0
    %v377 = vadd.f32 %v160, %v376
    %378 = vmatmul.bf16.gmra.mxu0 %v201
    %v379 = vpop.f32.mrf.mxu0
    %v380 = vadd.f32 %v160, %v379
    %v381 = vpop.f32.mrf.mxu0
    %v382 = vadd.f32 %v160, %v381
    %383 = vmatmul.bf16.gmra.mxu0 %v202
    %v384 = vpop.f32.mrf.mxu0
    %v385 = vadd.f32 %v160, %v384
    %v386 = vpop.f32.mrf.mxu0
    %v387 = vadd.f32 %v160, %v386
    %388 = vdwg.mxu0
    %v389 = vmax.f32 %v301, 0.0
    %v390 = vmax.f32 %v350, 0.0
    %v391 = vmax.f32 %v303, 0.0
    %v392 = vmax.f32 %v352, 0.0
    %v393 = vmax.f32 %v306, 0.0
    %v394 = vmax.f32 %v355, 0.0
    %v395 = vmax.f32 %v308, 0.0
    %v396 = vmax.f32 %v357, 0.0
    %v397 = vmax.f32 %v311, 0.0
    %v398 = vmax.f32 %v360, 0.0
    %v399 = vmax.f32 %v313, 0.0
    %v400 = vmax.f32 %v362, 0.0
    %v401 = vmax.f32 %v316, 0.0
    %v402 = vmax.f32 %v365, 0.0
    %v403 = vmax.f32 %v318, 0.0
    %v404 = vmax.f32 %v367, 0.0
    %v405 = vmax.f32 %v321, 0.0
    %v406 = vmax.f32 %v370, 0.0
    %v407 = vmax.f32 %v323, 0.0
    %v408 = vmax.f32 %v372, 0.0
    %v409 = vmax.f32 %v326, 0.0
    %v410 = vmax.f32 %v375, 0.0
    %v411 = vmax.f32 %v328, 0.0
    %v412 = vmax.f32 %v377, 0.0
    %v413 = vmax.f32 %v331, 0.0
    %v414 = vmax.f32 %v380, 0.0
    %v415 = vmax.f32 %v333, 0.0
    %v416 = vmax.f32 %v382, 0.0
    %v417 = vmax.f32 %v336, 0.0
    %v418 = vmax.f32 %v385, 0.0
    %v419 = vmax.f32 %v338, 0.0
    %v420 = vmax.f32 %v387, 0.0
    %v421 = vpack.c.bf16 %v391, %v389
    %v422 = vpack.c.bf16 %v392, %v390
    %v423 = vpack.c.bf16 %v395, %v393
    %v424 = vpack.c.bf16 %v396, %v394
    %v425 = vpack.c.bf16 %v399, %v397
    %v426 = vpack.c.bf16 %v400, %v398
    %v427 = vpack.c.bf16 %v403, %v401
    %v428 = vpack.c.bf16 %v404, %v402
    %v429 = vpack.c.bf16 %v407, %v405
    %v430 = vpack.c.bf16 %v408, %v406
    %v431 = vpack.c.bf16 %v411, %v409
    %v432 = vpack.c.bf16 %v412, %v410
    %v433 = vpack.c.bf16 %v415, %v413
    %v434 = vpack.c.bf16 %v416, %v414
    %v435 = vpack.c.bf16 %v419, %v417
    %v436 = vpack.c.bf16 %v420, %v418
    %v437 = vld [vmem:[#allocation8] sm:$0xf]
    %v438 = vld [vmem:[#allocation8 + $0x4] sm:$0xf]
    %v439 = vld [vmem:[#allocation8 + $0x8] sm:$0xf]
    %v440 = vld [vmem:[#allocation8 + $0xc] sm:$0xf]
    %v441 = vld [vmem:[#allocation8 + $0x10] sm:$0xf]
    %v442 = vld [vmem:[#allocation8 + $0x14] sm:$0xf]
    %v443 = vld [vmem:[#allocation8 + $0x18] sm:$0xf]
    %v444 = vld [vmem:[#allocation8 + $0x1c] sm:$0xf]
    %v445 = vld [vmem:[#allocation8 + $0x20] sm:$0xf]
    %v446 = vld [vmem:[#allocation8 + $0x24] sm:$0xf]
    %v447 = vld [vmem:[#allocation8 + $0x28] sm:$0xf]
    %v448 = vld [vmem:[#allocation8 + $0x2c] sm:$0xf]
    %v449 = vld [vmem:[#allocation8 + $0x30] sm:$0xf]
    %v450 = vld [vmem:[#allocation8 + $0x34] sm:$0xf]
    %v451 = vld [vmem:[#allocation8 + $0x38] sm:$0xf]
    %v452 = vld [vmem:[#allocation8 + $0x3c] sm:$0xf]
    %v453 = vld [vmem:[#allocation8 + $0x40] sm:$0xf]
    %v454 = vld [vmem:[#allocation8 + $0x44] sm:$0xf]
    %v455 = vld [vmem:[#allocation8 + $0x48] sm:$0xf]
    %v456 = vld [vmem:[#allocation8 + $0x4c] sm:$0xf]
    %v457 = vld [vmem:[#allocation8 + $0x50] sm:$0xf]
    %v458 = vld [vmem:[#allocation8 + $0x54] sm:$0xf]
    %v459 = vld [vmem:[#allocation8 + $0x58] sm:$0xf]
    %v460 = vld [vmem:[#allocation8 + $0x5c] sm:$0xf]
    %v461 = vld [vmem:[#allocation8 + $0x60] sm:$0xf]
    %v462 = vld [vmem:[#allocation8 + $0x64] sm:$0xf]
    %v463 = vld [vmem:[#allocation8 + $0x68] sm:$0xf]
    %v464 = vld [vmem:[#allocation8 + $0x6c] sm:$0xf]
    %v465 = vld [vmem:[#allocation8 + $0x70] sm:$0xf]
    %v466 = vld [vmem:[#allocation8 + $0x74] sm:$0xf]
    %v467 = vld [vmem:[#allocation8 + $0x78] sm:$0xf]
    %v468 = vld [vmem:[#allocation8 + $0x7c] sm:$0xf]
    %v469 = vld [vmem:[%s4] sm:$0x1]
    %v471 = vperm.slane %v469, 0
    %v505 = vunpack.c.l.b16 %v437
    %v506 = vunpack.c.l.b16 %v438
    %v507 = vunpack.c.l.b16 %v439
    %v508 = vunpack.c.l.b16 %v440
    %v509 = vunpack.c.l.b16 %v441
    %v510 = vunpack.c.l.b16 %v442
    %v511 = vunpack.c.l.b16 %v443
    %v512 = vunpack.c.l.b16 %v444
    %v513 = vunpack.c.l.b16 %v445
    %v514 = vunpack.c.l.b16 %v446
    %v515 = vunpack.c.l.b16 %v447
    %v516 = vunpack.c.l.b16 %v448
    %v517 = vunpack.c.l.b16 %v449
    %v518 = vunpack.c.l.b16 %v450
    %v519 = vunpack.c.l.b16 %v451
    %v520 = vunpack.c.l.b16 %v452
    %v521 = vunpack.c.l.b16 %v453
    %v522 = vunpack.c.l.b16 %v454
    %v523 = vunpack.c.l.b16 %v455
    %v524 = vunpack.c.l.b16 %v456
    %v525 = vunpack.c.l.b16 %v457
    %v526 = vunpack.c.l.b16 %v458
    %v527 = vunpack.c.l.b16 %v459
    %v528 = vunpack.c.l.b16 %v460
    %v529 = vunpack.c.l.b16 %v461
    %v530 = vunpack.c.l.b16 %v462
    %v531 = vunpack.c.l.b16 %v463
    %v532 = vunpack.c.l.b16 %v464
    %v533 = vunpack.c.l.b16 %v465
    %v534 = vunpack.c.l.b16 %v466
    %v535 = vunpack.c.l.b16 %v467
    %v536 = vunpack.c.l.b16 %v468
    %v537 = vpack.c.b16 %v506, %v505
    %v538 = vpack.c.b16 %v508, %v507
    %v539 = vpack.c.b16 %v510, %v509
    %v540 = vpack.c.b16 %v512, %v511
    %v541 = vpack.c.b16 %v514, %v513
    %v542 = vpack.c.b16 %v516, %v515
    %v543 = vpack.c.b16 %v518, %v517
    %v544 = vpack.c.b16 %v520, %v519
    %v545 = vpack.c.b16 %v522, %v521
    %v546 = vpack.c.b16 %v524, %v523
    %v547 = vpack.c.b16 %v526, %v525
    %v548 = vpack.c.b16 %v528, %v527
    %v549 = vpack.c.b16 %v530, %v529
    %v550 = vpack.c.b16 %v532, %v531
    %v551 = vpack.c.b16 %v534, %v533
    %v552 = vpack.c.b16 %v536, %v535
    %569 = vmatpush.bf16.msra.mxu0 %v544
    %570 = vmatpush.bf16.msra.mxu0 %v543
    %571 = vmatpush.bf16.msra.mxu0 %v542
    %572 = vmatpush.bf16.msra.mxu0 %v541
    %573 = vmatpush.bf16.msra.mxu0 %v540
    %574 = vmatpush.bf16.msra.mxu0 %v539
    %575 = vmatpush.bf16.msra.mxu0 %v538
    %576 = vmatpush.bf16.msra.mxu0 %v537
    %577 = vmatmul.bf16.gmra.mxu0 %v421
    %v578 = vpop.f32.mrf.mxu0
    %v579 = vadd.f32 %v471, %v578
    %v580 = vpop.f32.mrf.mxu0
    %v581 = vadd.f32 %v471, %v580
    %582 = vmatmul.bf16.gmra.mxu0 %v423
    %v583 = vpop.f32.mrf.mxu0
    %v584 = vadd.f32 %v471, %v583
    %v585 = vpop.f32.mrf.mxu0
    %v586 = vadd.f32 %v471, %v585
    %587 = vmatmul.bf16.gmra.mxu0 %v425
    %v588 = vpop.f32.mrf.mxu0
    %v589 = vadd.f32 %v471, %v588
    %v590 = vpop.f32.mrf.mxu0
    %v591 = vadd.f32 %v471, %v590
    %592 = vmatmul.bf16.gmra.mxu0 %v427
    %v593 = vpop.f32.mrf.mxu0
    %v594 = vadd.f32 %v471, %v593
    %v595 = vpop.f32.mrf.mxu0
    %v596 = vadd.f32 %v471, %v595
    %597 = vmatmul.bf16.gmra.mxu0 %v429
    %v598 = vpop.f32.mrf.mxu0
    %v599 = vadd.f32 %v471, %v598
    %v600 = vpop.f32.mrf.mxu0
    %v601 = vadd.f32 %v471, %v600
    %602 = vmatmul.bf16.gmra.mxu0 %v431
    %v603 = vpop.f32.mrf.mxu0
    %v604 = vadd.f32 %v471, %v603
    %v605 = vpop.f32.mrf.mxu0
    %v606 = vadd.f32 %v471, %v605
    %607 = vmatmul.bf16.gmra.mxu0 %v433
    %v608 = vpop.f32.mrf.mxu0
    %v609 = vadd.f32 %v471, %v608
    %v610 = vpop.f32.mrf.mxu0
    %v611 = vadd.f32 %v471, %v610
    %612 = vmatmul.bf16.gmra.mxu0 %v435
    %v613 = vpop.f32.mrf.mxu0
    %v614 = vadd.f32 %v471, %v613
    %v615 = vpop.f32.mrf.mxu0
    %v616 = vadd.f32 %v471, %v615
    %617 = vdwg.mxu0
    %618 = vmatpush.bf16.msra.mxu0 %v552
    %619 = vmatpush.bf16.msra.mxu0 %v551
    %620 = vmatpush.bf16.msra.mxu0 %v550
    %621 = vmatpush.bf16.msra.mxu0 %v549
    %622 = vmatpush.bf16.msra.mxu0 %v548
    %623 = vmatpush.bf16.msra.mxu0 %v547
    %624 = vmatpush.bf16.msra.mxu0 %v546
    %625 = vmatpush.bf16.msra.mxu0 %v545
    %626 = vmatmul.bf16.gmra.mxu0 %v422
    %v627 = vpop.f32.mrf.mxu0
    %v628 = vadd.f32 %v579, %v627
    %v629 = vpop.f32.mrf.mxu0
    %v630 = vadd.f32 %v581, %v629
    %631 = vmatmul.bf16.gmra.mxu0 %v424
    %v632 = vpop.f32.mrf.mxu0
    %v633 = vadd.f32 %v584, %v632
    %v634 = vpop.f32.mrf.mxu0
    %v635 = vadd.f32 %v586, %v634
    %636 = vmatmul.bf16.gmra.mxu0 %v426
    %v637 = vpop.f32.mrf.mxu0
    %v638 = vadd.f32 %v589, %v637
    %v639 = vpop.f32.mrf.mxu0
    %v640 = vadd.f32 %v591, %v639
    %641 = vmatmul.bf16.gmra.mxu0 %v428
    %v642 = vpop.f32.mrf.mxu0
    %v643 = vadd.f32 %v594, %v642
    %v644 = vpop.f32.mrf.mxu0
    %v645 = vadd.f32 %v596, %v644
    %646 = vmatmul.bf16.gmra.mxu0 %v430
    %v647 = vpop.f32.mrf.mxu0
    %v648 = vadd.f32 %v599, %v647
    %v649 = vpop.f32.mrf.mxu0
    %v650 = vadd.f32 %v601, %v649
    %651 = vmatmul.bf16.gmra.mxu0 %v432
    %v652 = vpop.f32.mrf.mxu0
    %v653 = vadd.f32 %v604, %v652
    %v654 = vpop.f32.mrf.mxu0
    %v655 = vadd.f32 %v606, %v654
    %656 = vmatmul.bf16.gmra.mxu0 %v434
    %v657 = vpop.f32.mrf.mxu0
    %v658 = vadd.f32 %v609, %v657
    %v659 = vpop.f32.mrf.mxu0
    %v660 = vadd.f32 %v611, %v659
    %661 = vmatmul.bf16.gmra.mxu0 %v436
    %v662 = vpop.f32.mrf.mxu0
    %v663 = vadd.f32 %v614, %v662
    %v664 = vpop.f32.mrf.mxu0
    %v665 = vadd.f32 %v616, %v664
    %666 = vdwg.mxu0
    %v667 = vmax.f32 %v628, 0.0
    %v668 = vmax.f32 %v630, 0.0
    %v669 = vmax.f32 %v633, 0.0
    %v670 = vmax.f32 %v635, 0.0
    %v671 = vmax.f32 %v638, 0.0
    %v672 = vmax.f32 %v640, 0.0
    %v673 = vmax.f32 %v643, 0.0
    %v674 = vmax.f32 %v645, 0.0
    %v675 = vmax.f32 %v648, 0.0
    %v676 = vmax.f32 %v650, 0.0
    %v677 = vmax.f32 %v653, 0.0
    %v678 = vmax.f32 %v655, 0.0
    %v679 = vmax.f32 %v658, 0.0
    %v680 = vmax.f32 %v660, 0.0
    %v681 = vmax.f32 %v663, 0.0
    %v682 = vmax.f32 %v665, 0.0
    %v683 = vpack.c.bf16 %v668, %v667
    %v684 = vpack.c.bf16 %v670, %v669
    %v685 = vpack.c.bf16 %v672, %v671
    %v686 = vpack.c.bf16 %v674, %v673
    %v687 = vpack.c.bf16 %v676, %v675
    %v688 = vpack.c.bf16 %v678, %v677
    %v689 = vpack.c.bf16 %v680, %v679
    %v690 = vpack.c.bf16 %v682, %v681
    %v691 = vld [vmem:[#allocation10] sm:$0xf]
    %v692 = vld [vmem:[#allocation10 + $0x4] sm:$0xf]
    %v693 = vld [vmem:[#allocation10 + $0x8] sm:$0xf]
    %v694 = vld [vmem:[#allocation10 + $0xc] sm:$0xf]
    %v695 = vld [vmem:[#allocation10 + $0x10] sm:$0xf]
    %v696 = vld [vmem:[#allocation10 + $0x14] sm:$0xf]
    %v697 = vld [vmem:[#allocation10 + $0x18] sm:$0xf]
    %v698 = vld [vmem:[#allocation10 + $0x1c] sm:$0xf]
    %v699 = vld [vmem:[#allocation10 + $0x20] sm:$0xf]
    %v700 = vld [vmem:[#allocation10 + $0x24] sm:$0xf]
    %v701 = vld [vmem:[#allocation10 + $0x28] sm:$0xf]
    %v702 = vld [vmem:[#allocation10 + $0x2c] sm:$0xf]
    %v703 = vld [vmem:[#allocation10 + $0x30] sm:$0xf]
    %v704 = vld [vmem:[#allocation10 + $0x34] sm:$0xf]
    %v705 = vld [vmem:[#allocation10 + $0x38] sm:$0xf]
    %v706 = vld [vmem:[#allocation10 + $0x3c] sm:$0xf]
    %v707 = vld [vmem:[%s6] sm:$0x1]
    %v709 = vperm.slane %v707, 0
    %v727 = vunpack.c.l.b16 %v691
    %v728 = vunpack.c.l.b16 %v692
    %v729 = vunpack.c.l.b16 %v693
    %v730 = vunpack.c.l.b16 %v694
    %v731 = vunpack.c.l.b16 %v695
    %v732 = vunpack.c.l.b16 %v696
    %v733 = vunpack.c.l.b16 %v697
    %v734 = vunpack.c.l.b16 %v698
    %v735 = vunpack.c.l.b16 %v699
    %v736 = vunpack.c.l.b16 %v700
    %v737 = vunpack.c.l.b16 %v701
    %v738 = vunpack.c.l.b16 %v702
    %v739 = vunpack.c.l.b16 %v703
    %v740 = vunpack.c.l.b16 %v704
    %v741 = vunpack.c.l.b16 %v705
    %v742 = vunpack.c.l.b16 %v706
    %v743 = vpack.c.b16 %v728, %v727
    %v744 = vpack.c.b16 %v730, %v729
    %v745 = vpack.c.b16 %v732, %v731
    %v746 = vpack.c.b16 %v734, %v733
    %v747 = vpack.c.b16 %v736, %v735
    %v748 = vpack.c.b16 %v738, %v737
    %v749 = vpack.c.b16 %v740, %v739
    %v750 = vpack.c.b16 %v742, %v741
    %759 = vmatpush.bf16.msra.mxu0 %v750
    %760 = vmatpush.bf16.msra.mxu0 %v749
    %761 = vmatpush.bf16.msra.mxu0 %v748
    %762 = vmatpush.bf16.msra.mxu0 %v747
    %763 = vmatpush.bf16.msra.mxu0 %v746
    %764 = vmatpush.bf16.msra.mxu0 %v745
    %765 = vmatpush.bf16.msra.mxu0 %v744
    %766 = vmatpush.bf16.msra.mxu0 %v743
    %767 = vmatmul.bf16.gmra.mxu0 %v683
    %v768 = vpop.f32.mrf.mxu0
    %v769 = vadd.f32 %v709, %v768
    %v770 = vpop.f32.mrf.mxu0
    %v771 = vadd.f32 %v709, %v770
    %772 = vmatmul.bf16.gmra.mxu0 %v684
    %v773 = vpop.f32.mrf.mxu0
    %v774 = vadd.f32 %v709, %v773
    %v775 = vpop.f32.mrf.mxu0
    %v776 = vadd.f32 %v709, %v775
    %777 = vmatmul.bf16.gmra.mxu0 %v685
    %v778 = vpop.f32.mrf.mxu0
    %v779 = vadd.f32 %v709, %v778
    %v780 = vpop.f32.mrf.mxu0
    %v781 = vadd.f32 %v709, %v780
    %782 = vmatmul.bf16.gmra.mxu0 %v686
    %v783 = vpop.f32.mrf.mxu0
    %v784 = vadd.f32 %v709, %v783
    %v785 = vpop.f32.mrf.mxu0
    %v786 = vadd.f32 %v709, %v785
    %787 = vmatmul.bf16.gmra.mxu0 %v687
    %v788 = vpop.f32.mrf.mxu0
    %v789 = vadd.f32 %v709, %v788
    %v790 = vpop.f32.mrf.mxu0
    %v791 = vadd.f32 %v709, %v790
    %792 = vmatmul.bf16.gmra.mxu0 %v688
    %v793 = vpop.f32.mrf.mxu0
    %v794 = vadd.f32 %v709, %v793
    %v795 = vpop.f32.mrf.mxu0
    %v796 = vadd.f32 %v709, %v795
    %797 = vmatmul.bf16.gmra.mxu0 %v689
    %v798 = vpop.f32.mrf.mxu0
    %v799 = vadd.f32 %v709, %v798
    %v800 = vpop.f32.mrf.mxu0
    %v801 = vadd.f32 %v709, %v800
    %802 = vmatmul.bf16.gmra.mxu0 %v690
    %v803 = vpop.f32.mrf.mxu0
    %v804 = vadd.f32 %v709, %v803
    %v805 = vpop.f32.mrf.mxu0
    %v806 = vadd.f32 %v709, %v805
    %807 = vdwg.mxu0
    %v808 = vmax.f32 %v769, 0.0
    %v809 = vmax.f32 %v771, 0.0
    %v810 = vmax.f32 %v774, 0.0
    %v811 = vmax.f32 %v776, 0.0
    %v812 = vmax.f32 %v779, 0.0
    %v813 = vmax.f32 %v781, 0.0
    %v814 = vmax.f32 %v784, 0.0
    %v815 = vmax.f32 %v786, 0.0
    %v816 = vmax.f32 %v789, 0.0
    %v817 = vmax.f32 %v791, 0.0
    %v818 = vmax.f32 %v794, 0.0
    %v819 = vmax.f32 %v796, 0.0
    %v820 = vmax.f32 %v799, 0.0
    %v821 = vmax.f32 %v801, 0.0
    %v822 = vmax.f32 %v804, 0.0
    %v823 = vmax.f32 %v806, 0.0
    %v824 = vpack.c.bf16 %v809, %v808
    %v825 = vpack.c.bf16 %v811, %v810
    %v826 = vpack.c.bf16 %v813, %v812
    %v827 = vpack.c.bf16 %v815, %v814
    %v828 = vpack.c.bf16 %v817, %v816
    %v829 = vpack.c.bf16 %v819, %v818
    %v830 = vpack.c.bf16 %v821, %v820
    %v831 = vpack.c.bf16 %v823, %v822
    %v832 = vld [vmem:[#allocation11] sm:$0xf]
    %v833 = vld [vmem:[#allocation11 + $0x4] sm:$0xf]
    %v834 = vld [vmem:[#allocation11 + $0x8] sm:$0xf]
    %v835 = vld [vmem:[#allocation11 + $0xc] sm:$0xf]
    %v836 = vld [vmem:[#allocation11 + $0x10] sm:$0xf]
    %v837 = vld [vmem:[#allocation11 + $0x14] sm:$0xf]
    %v838 = vld [vmem:[#allocation11 + $0x18] sm:$0xf]
    %v839 = vld [vmem:[#allocation11 + $0x1c] sm:$0xf]
    %v840 = vld [vmem:[#allocation11 + $0x20] sm:$0xf]
    %v841 = vld [vmem:[#allocation11 + $0x24] sm:$0xf]
    %v842 = vld [vmem:[#allocation11 + $0x28] sm:$0xf]
    %v843 = vld [vmem:[#allocation11 + $0x2c] sm:$0xf]
    %v844 = vld [vmem:[#allocation11 + $0x30] sm:$0xf]
    %v845 = vld [vmem:[#allocation11 + $0x34] sm:$0xf]
    %v846 = vld [vmem:[#allocation11 + $0x38] sm:$0xf]
    %v847 = vld [vmem:[#allocation11 + $0x3c] sm:$0xf]
    %v848 = vld [vmem:[%s8] sm:$0x1]
    %v850 = vperm.slane %v848, 0
    %v868 = vunpack.c.l.b16 %v832
    %v869 = vunpack.c.l.b16 %v833
    %v870 = vunpack.c.l.b16 %v834
    %v871 = vunpack.c.l.b16 %v835
    %v872 = vunpack.c.l.b16 %v836
    %v873 = vunpack.c.l.b16 %v837
    %v874 = vunpack.c.l.b16 %v838
    %v875 = vunpack.c.l.b16 %v839
    %v876 = vunpack.c.l.b16 %v840
    %v877 = vunpack.c.l.b16 %v841
    %v878 = vunpack.c.l.b16 %v842
    %v879 = vunpack.c.l.b16 %v843
    %v880 = vunpack.c.l.b16 %v844
    %v881 = vunpack.c.l.b16 %v845
    %v882 = vunpack.c.l.b16 %v846
    %v883 = vunpack.c.l.b16 %v847
    %v884 = vpack.c.b16 %v869, %v868
    %v885 = vpack.c.b16 %v871, %v870
    %v886 = vpack.c.b16 %v873, %v872
    %v887 = vpack.c.b16 %v875, %v874
    %v888 = vpack.c.b16 %v877, %v876
    %v889 = vpack.c.b16 %v879, %v878
    %v890 = vpack.c.b16 %v881, %v880
    %v891 = vpack.c.b16 %v883, %v882
    %900 = vmatpush.bf16.msra.mxu0 %v891
    %901 = vmatpush.bf16.msra.mxu0 %v890
    %902 = vmatpush.bf16.msra.mxu0 %v889
    %903 = vmatpush.bf16.msra.mxu0 %v888
    %904 = vmatpush.bf16.msra.mxu0 %v887
    %905 = vmatpush.bf16.msra.mxu0 %v886
    %906 = vmatpush.bf16.msra.mxu0 %v885
    %907 = vmatpush.bf16.msra.mxu0 %v884
    %908 = vmatmul.bf16.gmra.mxu0 %v824
    %v909 = vpop.f32.mrf.mxu0
    %v910 = vadd.f32 %v850, %v909
    %v911 = vpop.f32.mrf.mxu0
    %v912 = vadd.f32 %v850, %v911
    %913 = vmatmul.bf16.gmra.mxu0 %v825
    %v914 = vpop.f32.mrf.mxu0
    %v915 = vadd.f32 %v850, %v914
    %v916 = vpop.f32.mrf.mxu0
    %v917 = vadd.f32 %v850, %v916
    %918 = vmatmul.bf16.gmra.mxu0 %v826
    %v919 = vpop.f32.mrf.mxu0
    %v920 = vadd.f32 %v850, %v919
    %v921 = vpop.f32.mrf.mxu0
    %v922 = vadd.f32 %v850, %v921
    %923 = vmatmul.bf16.gmra.mxu0 %v827
    %v924 = vpop.f32.mrf.mxu0
    %v925 = vadd.f32 %v850, %v924
    %v926 = vpop.f32.mrf.mxu0
    %v927 = vadd.f32 %v850, %v926
    %928 = vmatmul.bf16.gmra.mxu0 %v828
    %v929 = vpop.f32.mrf.mxu0
    %v930 = vadd.f32 %v850, %v929
    %v931 = vpop.f32.mrf.mxu0
    %v932 = vadd.f32 %v850, %v931
    %933 = vmatmul.bf16.gmra.mxu0 %v829
    %v934 = vpop.f32.mrf.mxu0
    %v935 = vadd.f32 %v850, %v934
    %v936 = vpop.f32.mrf.mxu0
    %v937 = vadd.f32 %v850, %v936
    %938 = vmatmul.bf16.gmra.mxu0 %v830
    %v939 = vpop.f32.mrf.mxu0
    %v940 = vadd.f32 %v850, %v939
    %v941 = vpop.f32.mrf.mxu0
    %v942 = vadd.f32 %v850, %v941
    %943 = vmatmul.bf16.gmra.mxu0 %v831
    %v944 = vpop.f32.mrf.mxu0
    %v945 = vadd.f32 %v850, %v944
    %v946 = vpop.f32.mrf.mxu0
    %v947 = vadd.f32 %v850, %v946
    %948 = vdwg.mxu0
    %949 = vst [vmem:[#allocation13] sm:$0xff] %v910
    %950 = vst [vmem:[#allocation13 + $0x8] sm:$0xff] %v912
    %951 = vst [vmem:[#allocation13 + $0x10] sm:$0xff] %v915
    %952 = vst [vmem:[#allocation13 + $0x18] sm:$0xff] %v917
    %953 = vst [vmem:[#allocation13 + $0x20] sm:$0xff] %v920
    %954 = vst [vmem:[#allocation13 + $0x28] sm:$0xff] %v922
    %955 = vst [vmem:[#allocation13 + $0x30] sm:$0xff] %v925
    %956 = vst [vmem:[#allocation13 + $0x38] sm:$0xff] %v927
    %957 = vst [vmem:[#allocation13 + $0x40] sm:$0xff] %v930
    %958 = vst [vmem:[#allocation13 + $0x48] sm:$0xff] %v932
    %959 = vst [vmem:[#allocation13 + $0x50] sm:$0xff] %v935
    %960 = vst [vmem:[#allocation13 + $0x58] sm:$0xff] %v937
    %961 = vst [vmem:[#allocation13 + $0x60] sm:$0xff] %v940
    %962 = vst [vmem:[#allocation13 + $0x68] sm:$0xff] %v942
    %963 = vst [vmem:[#allocation13 + $0x70] sm:$0xff] %v945
    %964 = vst [vmem:[#allocation13 + $0x78] sm:$0xff] %v947
    // Predicated region
    $region62: #{tpu_custom_call.1} parent=1 // pred_check
      _
    $region63: #{tpu_custom_call.1} parent=1 // pred_check_branch
      %966 = sbr.rel (0) target = $region65
    $region64: #{tpu_custom_call.1} parent=1 // pred_region
      %968 = vsyncadd [#allocation4], 0
      %s969 = sshll.u32 [#allocation13], 4
      %s970 = int_to_ptr.vmem [resolvable:$true] %s969
      %s971 = sshll.u32 %s9, 4
      %s972 = int_to_ptr.hbm [resolvable:$true] %s971
      %977 = dma.vmem_to_hbm [thread:$0]  %s970, 2048, %s972, [#allocation4], 128, 128, 8
    $region65: #{tpu_custom_call.1} parent=1 // pred_fallthru
      _
    // Predicated region
    $region66: #{tpu_custom_call.1} parent=1 // pred_check
      _
    $region67: #{tpu_custom_call.1} parent=1 // pred_check_branch
      %979 = sbr.rel (0) target = $region69
    $region68: #{tpu_custom_call.1} parent=1 // pred_region
      %981 = dma.done [#allocation4], 2048
    $region69: #{tpu_custom_call.1} parent=1 // pred_fallthru
      _
    %982 = vsyncpa [#allocation3], 1
    %983 = vsyncpa [#allocation6], 1
    %984 = vsyncpa [#allocation9], 1
    %985 = vsyncpa [#allocation12], 1
    %986 = vsyncpa [#allocation4], 1

</llo_original>
